<compile_context>
chip_gen: v5e
topology: v5e:2x2
jax: 0.10.0
libtpu: 0.0.40
codegen_flags: <defaults>
</compile_context>

<pallas_src>
import functools

import jax
import jax.numpy as jnp
from jax.experimental import pallas as pl
from jax.experimental.pallas import tpu as pltpu

_BN_EPS = 1e-5
_LANE = 128
_SUBLANE = 8


def _round_up(x, m):
    return (x + m - 1) // m * m


# ---------------------------------------------------------------------------
# Kernel: whole MLP fused in one pallas_call.
# ---------------------------------------------------------------------------
def _fused_mlp_kernel(num_layers, *refs):
    """refs = (x_ref, w_0, b_0, ..., w_{L-1}, b_{L-1}, o_ref).

    Weights are bf16 with eval-mode BatchNorm pre-folded.  Matmuls run
    bf16 x bf16 -> f32 on the MXU; bias add / ReLU stay in f32 on the VPU.
    Activations never leave on-chip memory between layers.
    """
    x_ref = refs[0]
    o_ref = refs[-1]
    wb = refs[1:-1]

    h = x_ref[...]                                   # (tile_m, in_p) f32
    for i in range(num_layers):
        w = wb[2 * i][...]                           # (fan_in_p, fan_out_p) bf16
        b = wb[2 * i + 1][...]                       # (1, fan_out_p) f32
        h = jnp.dot(h.astype(jnp.bfloat16), w,
                    preferred_element_type=jnp.float32) + b
        if i < num_layers - 1:
            h = jnp.maximum(h, 0.0)                  # dropout = identity in eval
        # TODO(synk): for very large hidden dims, keep inter-layer h in bf16
        # here to halve spill footprint; kept f32 for accuracy at small shapes.
    o_ref[...] = h.astype(o_ref.dtype)


def _resident_spec(shape):
    """Constant-index resident block; single-buffered when supported."""
    if hasattr(pl, "Buffered"):
        try:
            return pl.BlockSpec(shape, lambda i: (0, 0),
                                pipeline_mode=pl.Buffered(1))
        except TypeError:
            pass
    return pl.BlockSpec(shape, lambda i: (0, 0))


# ---------------------------------------------------------------------------
# Parameter construction / one-time preparation (hoisted off the hot path).
# ---------------------------------------------------------------------------
def init_mlp_params(key, in_channels, hidden_channels, out_channels, num_layers):
    """Deterministic synthetic parameters matching the module's shapes.

    Linear weights are stored already transposed: (fan_in, fan_out).
    """
    params = {"convs": [], "bns": []}
    dims = [in_channels] + [hidden_channels] * (num_layers - 1) + [out_channels]
    for i in range(num_layers):
        fan_in, fan_out = dims[i], dims[i + 1]
        key, kw, kb = jax.random.split(key, 3)
        bound = 1.0 / (fan_in ** 0.5)
        w = jax.random.uniform(kw, (fan_in, fan_out), jnp.float32, -bound, bound)
        b = jax.random.uniform(kb, (fan_out,), jnp.float32, -bound, bound)
        params["convs"].append((w, b))
    for _ in range(num_layers - 1):
        key, kg, kbt, km, kv = jax.random.split(key, 5)
        gamma = 1.0 + 0.1 * jax.random.normal(kg, (hidden_channels,), jnp.float32)
        beta = 0.1 * jax.random.normal(kbt, (hidden_channels,), jnp.float32)
        mean = 0.1 * jax.random.normal(km, (hidden_channels,), jnp.float32)
        var = jnp.abs(1.0 + 0.1 * jax.random.normal(kv, (hidden_channels,), jnp.float32))
        params["bns"].append((gamma, beta, mean, var))
    return params


def prepare_mlp_params(params):
    """One-time prep: fold eval-mode BN into the Linear (f32), zero-pad
    fan_in/fan_out to multiples of 128, cast weights to bf16 (biases stay f32).
    Call once and reuse; keeps the per-call path free of weight copies."""
    convs, bns = params["convs"], params["bns"]
    num_layers = len(convs)
    padded = []
    for i in range(num_layers):
        w, b = convs[i]
        w = w.astype(jnp.float32)
        b = b.astype(jnp.float32)
        if i < num_layers - 1:
            gamma, beta, mean, var = bns[i]
            scale = gamma / jnp.sqrt(var + _BN_EPS)      # per output channel
            w = w * scale[None, :]
            b = (b - mean) * scale + beta
        fi, fo = w.shape
        fi_p, fo_p = _round_up(fi, _LANE), _round_up(fo, _LANE)
        if (fi_p, fo_p) != (fi, fo):
            w = jnp.zeros((fi_p, fo_p), jnp.float32).at[:fi, :fo].set(w)
            b = jnp.zeros((fo_p,), jnp.float32).at[:fo].set(b)
        padded.append((w.astype(jnp.bfloat16), b.reshape(1, -1)))
    in_c = convs[0][0].shape[0]
    out_c = convs[-1][0].shape[1]
    return tuple(padded), in_c, out_c


def _pick_tile_m(n, in_p, out_p, max_dim_p, weight_bytes):
    """Largest row tile fitting a conservative VMEM budget (safe on v7x's
    64 MiB), with >= 2 grid steps when N allows (v7x has 2 TensorCores)."""
    n8 = _round_up(max(n, 1), _SUBLANE)
    if n8 <= 128:
        return n8
    budget = 48 * 1024 * 1024
    tile = 128
    for cand in (1024, 512, 256, 128):
        if cand > n8:
            continue
        act = 2 * cand * (in_p + out_p) * 4          # double-buffered in/out tiles
        act += 2 * cand * max_dim_p * 4              # intermediate activations
        if weight_bytes + act <= budget:
            tile = cand
            break
    while tile > 128 and (_round_up(n8, tile) // tile) < 2:
        tile //= 2
    return tile


# ---------------------------------------------------------------------------
# Forward pass.
# ---------------------------------------------------------------------------
@functools.partial(jax.jit, static_argnames=("in_c", "out_c"))
def _mlp_forward_prepared(x, padded_wb, in_c, out_c):
    num_layers = len(padded_wb)
    n = x.shape[0]
    in_p = padded_wb[0][0].shape[0]
    out_p = padded_wb[-1][0].shape[1]
    max_dim_p = max([in_p] + [w.shape[1] for w, _ in padded_wb])
    weight_bytes = sum(w.size * w.dtype.itemsize + b.size * b.dtype.itemsize
                       for w, b in padded_wb)

    tile_m = _pick_tile_m(n, in_p, out_p, max_dim_p, weight_bytes)
    n_p = _round_up(n, tile_m)

    x = x.astype(jnp.float32)
    if (n_p, in_p) != (n, in_c):                      # skip copy when aligned
        x = jnp.zeros((n_p, in_p), jnp.float32).at[:n, :in_c].set(x)

    flat_inputs = [x]
    in_specs = [pl.BlockSpec((tile_m, in_p), lambda i: (i, 0))]
    for wp, bp in padded_wb:
        in_specs.append(_resident_spec(wp.shape))     # resident bf16 weight
        in_specs.append(_resident_spec(bp.shape))     # resident f32 bias
        flat_inputs.extend([wp, bp])
    out_spec = pl.BlockSpec((tile_m, out_p), lambda i: (i, 0))

    # Explicit VMEM budget: single-buffered weights/biases + double-buffered
    # x / out tiles + intermediate activations, with ~50% headroom.
    act_bytes = 2 * tile_m * (in_p + out_p) * 4 + 2 * tile_m * max_dim_p * 4
    vmem_limit = int(1.5 * (weight_bytes + act_bytes))
    vmem_limit = min(max(vmem_limit, 32 * 1024 * 1024), 100 * 1024 * 1024)

    y_p = pl.pallas_call(
        functools.partial(_fused_mlp_kernel, num_layers),
        out_shape=jax.ShapeDtypeStruct((n_p, out_p), jnp.float32),
        grid_spec=pltpu.PrefetchScalarGridSpec(
            num_scalar_prefetch=0,
            grid=(n_p // tile_m,),
            in_specs=in_specs,
            out_specs=out_spec,
        ),
        compiler_params=pltpu.CompilerParams(
            dimension_semantics=("parallel",),
            vmem_limit_bytes=vmem_limit,
        ),
    )(*flat_inputs)

    # Slice back to the true (N, out_channels) result.
    return y_p[:n, :out_c]


def mlp_forward(x, prepared):
    padded_wb, in_c, out_c = prepared
    return _mlp_forward_prepared(x, padded_wb, in_c, out_c)


def mlp_forward_ref(x, params):
    """Plain-JAX f32 reference (unfolded BN) for correctness checking."""
    convs = params["convs"]
    bns = params["bns"]
    for i in range(len(convs) - 1):
        w, b = convs[i]
        gamma, beta, mean, var = bns[i]
        h = x @ w + b
        h = (h - mean) / jnp.sqrt(var + _BN_EPS) * gamma + beta
        x = jnp.maximum(h, 0.0)
    w, b = convs[-1]
    return x @ w + b


if __name__ == "__main__":
    # Small shapes: N=16 nodes, in=32, hidden=64, out=8, num_layers=3.
    N, IN_C, HID_C, OUT_C, NUM_LAYERS = 16, 32, 64, 8, 3

    key = jax.random.PRNGKey(0)
    key, kx, kp = jax.random.split(key, 3)
    x = jax.random.normal(kx, (N, IN_C), jnp.float32)
    params = init_mlp_params(kp, IN_C, HID_C, OUT_C, NUM_LAYERS)

    prepared = prepare_mlp_params(params)             # one-time weight prep
    out = mlp_forward(x, prepared)
    out = jax.block_until_ready(out)

    ref = mlp_forward_ref(x, params)
    assert out.shape == (N, OUT_C), out.shape
    # Tolerance loosened vs. f32-only version because matmuls run in bf16.
    assert jnp.allclose(out, ref, atol=5e-2, rtol=5e-2), (
        float(jnp.max(jnp.abs(out - ref))))

    print("KERNEL_OK")
</pallas_src>

<mosaic_0001>
module attributes {stable_mosaic.version = 11 : i64} {
  func.func @_fused_mlp_kernel(%arg0: i32, %arg1: memref<16x128xf32, #tpu.memory_space<vmem>>, %arg2: memref<128x128xbf16, #tpu.memory_space<vmem>>, %arg3: memref<1x128xf32, #tpu.memory_space<vmem>>, %arg4: memref<128x128xbf16, #tpu.memory_space<vmem>>, %arg5: memref<1x128xf32, #tpu.memory_space<vmem>>, %arg6: memref<128x128xbf16, #tpu.memory_space<vmem>>, %arg7: memref<1x128xf32, #tpu.memory_space<vmem>>, %arg8: memref<16x128xf32, #tpu.memory_space<vmem>>) attributes {dimension_semantics = [#tpu.dimension_semantics<parallel>], iteration_bounds = array<i64: 1>, scalar_prefetch = 0 : i64, scratch_operands = 0 : i64, tpu.core_type = #tpu.core_type<tc>, window_params = [{transform_indices = @transform_0, window_bounds = array<i64: 16, 128>}, {pipeline_mode = #tpu.pipeline_mode<synchronous>, transform_indices = @transform_1, window_bounds = array<i64: 128, 128>}, {pipeline_mode = #tpu.pipeline_mode<synchronous>, transform_indices = @transform_2, window_bounds = array<i64: 1, 128>}, {pipeline_mode = #tpu.pipeline_mode<synchronous>, transform_indices = @transform_3, window_bounds = array<i64: 128, 128>}, {pipeline_mode = #tpu.pipeline_mode<synchronous>, transform_indices = @transform_4, window_bounds = array<i64: 1, 128>}, {pipeline_mode = #tpu.pipeline_mode<synchronous>, transform_indices = @transform_5, window_bounds = array<i64: 128, 128>}, {pipeline_mode = #tpu.pipeline_mode<synchronous>, transform_indices = @transform_6, window_bounds = array<i64: 1, 128>}, {transform_indices = @transform_7, window_bounds = array<i64: 16, 128>}]} {
    %c0 = arith.constant 0 : index
    %c0_0 = arith.constant 0 : index
    %0 = vector.load %arg1[%c0, %c0_0] : memref<16x128xf32, #tpu.memory_space<vmem>>, vector<16x128xf32>
    %c0_1 = arith.constant 0 : index
    %c0_2 = arith.constant 0 : index
    %1 = vector.load %arg2[%c0_1, %c0_2] : memref<128x128xbf16, #tpu.memory_space<vmem>>, vector<128x128xbf16>
    %c0_3 = arith.constant 0 : index
    %c0_4 = arith.constant 0 : index
    %2 = vector.load %arg3[%c0_3, %c0_4] : memref<1x128xf32, #tpu.memory_space<vmem>>, vector<1x128xf32>
    %3 = arith.truncf %0 : vector<16x128xf32> to vector<16x128xbf16>
    %cst = arith.constant dense<0.000000e+00> : vector<16x128xf32>
    %4 = tpu.matmul %3, %1, %cst {dimension_numbers = #tpu.dot_dimension_numbers<[1], [0], [0], [1], [0, 0, 1, 1], [], []>} : vector<16x128xbf16>, vector<128x128xbf16>, vector<16x128xf32> -> vector<16x128xf32>
    %5 = vector.broadcast %2 : vector<1x128xf32> to vector<16x128xf32>
    %6 = arith.addf %4, %5 : vector<16x128xf32>
    %cst_5 = arith.constant 0.000000e+00 : f32
    %7 = vector.broadcast %cst_5 : f32 to vector<16x128xf32>
    %8 = arith.maximumf %6, %7 : vector<16x128xf32>
    %c0_6 = arith.constant 0 : index
    %c0_7 = arith.constant 0 : index
    %9 = vector.load %arg4[%c0_6, %c0_7] : memref<128x128xbf16, #tpu.memory_space<vmem>>, vector<128x128xbf16>
    %c0_8 = arith.constant 0 : index
    %c0_9 = arith.constant 0 : index
    %10 = vector.load %arg5[%c0_8, %c0_9] : memref<1x128xf32, #tpu.memory_space<vmem>>, vector<1x128xf32>
    %11 = arith.truncf %8 : vector<16x128xf32> to vector<16x128xbf16>
    %cst_10 = arith.constant dense<0.000000e+00> : vector<16x128xf32>
    %12 = tpu.matmul %11, %9, %cst_10 {dimension_numbers = #tpu.dot_dimension_numbers<[1], [0], [0], [1], [0, 0, 1, 1], [], []>} : vector<16x128xbf16>, vector<128x128xbf16>, vector<16x128xf32> -> vector<16x128xf32>
    %13 = vector.broadcast %10 : vector<1x128xf32> to vector<16x128xf32>
    %14 = arith.addf %12, %13 : vector<16x128xf32>
    %cst_11 = arith.constant 0.000000e+00 : f32
    %15 = vector.broadcast %cst_11 : f32 to vector<16x128xf32>
    %16 = arith.maximumf %14, %15 : vector<16x128xf32>
    %c0_12 = arith.constant 0 : index
    %c0_13 = arith.constant 0 : index
    %17 = vector.load %arg6[%c0_12, %c0_13] : memref<128x128xbf16, #tpu.memory_space<vmem>>, vector<128x128xbf16>
    %c0_14 = arith.constant 0 : index
    %c0_15 = arith.constant 0 : index
    %18 = vector.load %arg7[%c0_14, %c0_15] : memref<1x128xf32, #tpu.memory_space<vmem>>, vector<1x128xf32>
    %19 = arith.truncf %16 : vector<16x128xf32> to vector<16x128xbf16>
    %cst_16 = arith.constant dense<0.000000e+00> : vector<16x128xf32>
    %20 = tpu.matmul %19, %17, %cst_16 {dimension_numbers = #tpu.dot_dimension_numbers<[1], [0], [0], [1], [0, 0, 1, 1], [], []>} : vector<16x128xbf16>, vector<128x128xbf16>, vector<16x128xf32> -> vector<16x128xf32>
    %21 = vector.broadcast %18 : vector<1x128xf32> to vector<16x128xf32>
    %22 = arith.addf %20, %21 : vector<16x128xf32>
    %c0_17 = arith.constant 0 : index
    %c0_18 = arith.constant 0 : index
    %23 = vector.load %arg8[%c0_17, %c0_18] : memref<16x128xf32, #tpu.memory_space<vmem>>, vector<16x128xf32>
    tpu.vector_store %arg8[%c0_17, %c0_18], %22 {strides = array<i32>} : memref<16x128xf32, #tpu.memory_space<vmem>>, vector<16x128xf32>,
    return
  }
  func.func @transform_0(%arg0: i32) -> (i32, i32) {
    %c0_i32 = arith.constant 0 : i32
    %c0_i32_0 = arith.constant 0 : i32
    return %arg0, %c0_i32 : i32, i32
  }
  func.func @transform_1(%arg0: i32) -> (i32, i32) {
    %c0_i32 = arith.constant 0 : i32
    %c0_i32_0 = arith.constant 0 : i32
    %c0_i32_1 = arith.constant 0 : i32
    return %c0_i32, %c0_i32_0 : i32, i32
  }
  func.func @transform_2(%arg0: i32) -> (i32, i32) {
    %c0_i32 = arith.constant 0 : i32
    %c0_i32_0 = arith.constant 0 : i32
    %c0_i32_1 = arith.constant 0 : i32
    return %c0_i32, %c0_i32_0 : i32, i32
  }
  func.func @transform_3(%arg0: i32) -> (i32, i32) {
    %c0_i32 = arith.constant 0 : i32
    %c0_i32_0 = arith.constant 0 : i32
    %c0_i32_1 = arith.constant 0 : i32
    return %c0_i32, %c0_i32_0 : i32, i32
  }
  func.func @transform_4(%arg0: i32) -> (i32, i32) {
    %c0_i32 = arith.constant 0 : i32
    %c0_i32_0 = arith.constant 0 : i32
    %c0_i32_1 = arith.constant 0 : i32
    return %c0_i32, %c0_i32_0 : i32, i32
  }
  func.func @transform_5(%arg0: i32) -> (i32, i32) {
    %c0_i32 = arith.constant 0 : i32
    %c0_i32_0 = arith.constant 0 : i32
    %c0_i32_1 = arith.constant 0 : i32
    return %c0_i32, %c0_i32_0 : i32, i32
  }
  func.func @transform_6(%arg0: i32) -> (i32, i32) {
    %c0_i32 = arith.constant 0 : i32
    %c0_i32_0 = arith.constant 0 : i32
    %c0_i32_1 = arith.constant 0 : i32
    return %c0_i32, %c0_i32_0 : i32, i32
  }
  func.func @transform_7(%arg0: i32) -> (i32, i32) {
    %c0_i32 = arith.constant 0 : i32
    %c0_i32_0 = arith.constant 0 : i32
    return %arg0, %c0_i32 : i32, i32
  }
}

</mosaic_0001>

<llo_original>
// kernel: _mlp_forward_prepared.1
$region0: #{_mlp_forward_prepared.1}
  #allocation0 [shape = 'u32[]', space=smem, size = 0x4, offset = 0x4, fixed_abs, tag = 'smem constant byte address 0x4 - core index']
  #allocation1 [shape = 'u32[72,128]{1,0:T(1,128)}', space=vmem, size = 0x9000, scoped, tag = 'internal scratch']
  %s0 = inlined_call_operand.vmem [shape: f32[16,128], index: 0, kind: input, shape index: {}]
  %s1 = inlined_call_operand.vmem [shape: bf16[128,128], index: 1, kind: input, shape index: {}]
  %s2 = inlined_call_operand.vmem [shape: f32[1,128], index: 2, kind: input, shape index: {}]
  %s3 = inlined_call_operand.hbm [shape: bf16[128,128], index: 3, kind: input, shape index: {}]
  %s4 = inlined_call_operand.vmem [shape: f32[1,128], index: 4, kind: input, shape index: {}]
  %s5 = inlined_call_operand.hbm [shape: bf16[128,128], index: 5, kind: input, shape index: {}]
  %s6 = inlined_call_operand.vmem [shape: f32[1,128], index: 6, kind: input, shape index: {}]
  %s7 = inlined_call_operand.vmem [shape: f32[16,128], index: 7, kind: output, shape index: {}]
  %s8 = sld [smem:[#allocation0]]
  $region46: #{_mlp_forward_prepared.1} parent=0
    _
  %s10 = ssub.s32 1, %s8
  %s11 = scalar_select 0, %s10, %s8
  $region1: #{_mlp_forward_prepared.1} parent=0
    #allocation2 [shape = 'u8[32768]{0}', space=vmem, size = 0x8000, scoped, tag = 'input window, operand 3, single buffered']
    #allocation3 [shape = 's32[1]{0}', space=sflag, size = 0x4, scoped, tag = 'scoped memory for _mlp_forward_prepared.1']
    #allocation4 [shape = 'u8[32768]{0}', space=vmem, size = 0x8000, scoped, tag = 'input window, operand 5, single buffered']
    #allocation5 [shape = 's32[1]{0}', space=sflag, size = 0x4, scoped, tag = 'scoped memory for _mlp_forward_prepared.1']
    %12 = vsyncpa [#allocation3], 0
    %13 = vsyncpa [#allocation5], 0
    // Predicated region
    $region2: #{_mlp_forward_prepared.1} parent=1 // pred_check
      _
    $region3: #{_mlp_forward_prepared.1} parent=1 // pred_check_branch
      %15 = sbr.rel (0) target = $region5
    $region4: #{_mlp_forward_prepared.1} parent=1 // pred_region
      _
    $region5: #{_mlp_forward_prepared.1} parent=1 // pred_fallthru
      _
    // Predicated region
    $region6: #{_mlp_forward_prepared.1} parent=1 // pred_check
      _
    $region7: #{_mlp_forward_prepared.1} parent=1 // pred_check_branch
      %17 = sbr.rel (0) target = $region9
    $region8: #{_mlp_forward_prepared.1} parent=1 // pred_region
      _
    $region9: #{_mlp_forward_prepared.1} parent=1 // pred_fallthru
      _
    // Predicated region
    $region10: #{_mlp_forward_prepared.1} parent=1 // pred_check
      _
    $region11: #{_mlp_forward_prepared.1} parent=1 // pred_check_branch
      %19 = sbr.rel (0) target = $region13
    $region12: #{_mlp_forward_prepared.1} parent=1 // pred_region
      _
    $region13: #{_mlp_forward_prepared.1} parent=1 // pred_fallthru
      _
    // Predicated region
    $region14: #{_mlp_forward_prepared.1} parent=1 // pred_check
      _
    $region15: #{_mlp_forward_prepared.1} parent=1 // pred_check_branch
      %21 = sbr.rel (0) target = $region17
    $region16: #{_mlp_forward_prepared.1} parent=1 // pred_region
      %23 = vsyncadd [#allocation3], 0
      %s24 = sshll.u32 %s3, 4
      %s25 = int_to_ptr.hbm [resolvable:$true] %s24
      %s26 = sshll.u32 [#allocation2], 4
      %s27 = int_to_ptr.vmem [resolvable:$true] %s26
      %32 = dma.hbm_to_vmem [thread:$0]  %s25, 1024, %s27, [#allocation3], 64, 64, 4
    $region17: #{_mlp_forward_prepared.1} parent=1 // pred_fallthru
      _
    // Predicated region
    $region18: #{_mlp_forward_prepared.1} parent=1 // pred_check
      _
    $region19: #{_mlp_forward_prepared.1} parent=1 // pred_check_branch
      %34 = sbr.rel (0) target = $region21
    $region20: #{_mlp_forward_prepared.1} parent=1 // pred_region
      _
    $region21: #{_mlp_forward_prepared.1} parent=1 // pred_fallthru
      _
    // Predicated region
    $region22: #{_mlp_forward_prepared.1} parent=1 // pred_check
      _
    $region23: #{_mlp_forward_prepared.1} parent=1 // pred_check_branch
      %36 = sbr.rel (0) target = $region25
    $region24: #{_mlp_forward_prepared.1} parent=1 // pred_region
      %38 = vsyncadd [#allocation5], 0
      %s39 = sshll.u32 %s5, 4
      %s40 = int_to_ptr.hbm [resolvable:$true] %s39
      %s41 = sshll.u32 [#allocation4], 4
      %s42 = int_to_ptr.vmem [resolvable:$true] %s41
      %47 = dma.hbm_to_vmem [thread:$0]  %s40, 1024, %s42, [#allocation5], 64, 64, 4
    $region25: #{_mlp_forward_prepared.1} parent=1 // pred_fallthru
      _
    // Predicated region
    $region26: #{_mlp_forward_prepared.1} parent=1 // pred_check
      _
    $region27: #{_mlp_forward_prepared.1} parent=1 // pred_check_branch
      %49 = sbr.rel (0) target = $region29
    $region28: #{_mlp_forward_prepared.1} parent=1 // pred_region
      _
    $region29: #{_mlp_forward_prepared.1} parent=1 // pred_fallthru
      _
    // Predicated region
    $region30: #{_mlp_forward_prepared.1} parent=1 // pred_check
      _
    $region31: #{_mlp_forward_prepared.1} parent=1 // pred_check_branch
      %51 = sbr.rel (0) target = $region33
    $region32: #{_mlp_forward_prepared.1} parent=1 // pred_region
      %53 = dma.done [#allocation3], 1024
    $region33: #{_mlp_forward_prepared.1} parent=1 // pred_fallthru
      _
    // Predicated region
    $region34: #{_mlp_forward_prepared.1} parent=1 // pred_check
      _
    $region35: #{_mlp_forward_prepared.1} parent=1 // pred_check_branch
      %55 = sbr.rel (0) target = $region37
    $region36: #{_mlp_forward_prepared.1} parent=1 // pred_region
      %57 = dma.done [#allocation5], 1024
    $region37: #{_mlp_forward_prepared.1} parent=1 // pred_fallthru
      _
    %v58 = vld [vmem:[%s0] sm:$0xff]
    %v59 = vld [vmem:[%s0 + $0x8] sm:$0xff]
    %v60 = vld [vmem:[%s1] sm:$0xf]
    %v61 = vld [vmem:[%s1 + $0x4] sm:$0xf]
    %v62 = vld [vmem:[%s1 + $0x8] sm:$0xf]
    %v63 = vld [vmem:[%s1 + $0xc] sm:$0xf]
    %v64 = vld [vmem:[%s1 + $0x10] sm:$0xf]
    %v65 = vld [vmem:[%s1 + $0x14] sm:$0xf]
    %v66 = vld [vmem:[%s1 + $0x18] sm:$0xf]
    %v67 = vld [vmem:[%s1 + $0x1c] sm:$0xf]
    %v68 = vld [vmem:[%s1 + $0x20] sm:$0xf]
    %v69 = vld [vmem:[%s1 + $0x24] sm:$0xf]
    %v70 = vld [vmem:[%s1 + $0x28] sm:$0xf]
    %v71 = vld [vmem:[%s1 + $0x2c] sm:$0xf]
    %v72 = vld [vmem:[%s1 + $0x30] sm:$0xf]
    %v73 = vld [vmem:[%s1 + $0x34] sm:$0xf]
    %v74 = vld [vmem:[%s1 + $0x38] sm:$0xf]
    %v75 = vld [vmem:[%s1 + $0x3c] sm:$0xf]
    %v76 = vld [vmem:[%s2] sm:$0x1]
    %v77 = vpack.c.bf16 %v59, %v58
    %v79 = vperm.slane %v76, 0
    %v97 = vunpack.c.l.b16 %v60
    %v98 = vunpack.c.l.b16 %v61
    %v99 = vunpack.c.l.b16 %v62
    %v100 = vunpack.c.l.b16 %v63
    %v101 = vunpack.c.l.b16 %v64
    %v102 = vunpack.c.l.b16 %v65
    %v103 = vunpack.c.l.b16 %v66
    %v104 = vunpack.c.l.b16 %v67
    %v105 = vunpack.c.l.b16 %v68
    %v106 = vunpack.c.l.b16 %v69
    %v107 = vunpack.c.l.b16 %v70
    %v108 = vunpack.c.l.b16 %v71
    %v109 = vunpack.c.l.b16 %v72
    %v110 = vunpack.c.l.b16 %v73
    %v111 = vunpack.c.l.b16 %v74
    %v112 = vunpack.c.l.b16 %v75
    %v113 = vpack.c.b16 %v98, %v97
    %v114 = vpack.c.b16 %v100, %v99
    %v115 = vpack.c.b16 %v102, %v101
    %v116 = vpack.c.b16 %v104, %v103
    %v117 = vpack.c.b16 %v106, %v105
    %v118 = vpack.c.b16 %v108, %v107
    %v119 = vpack.c.b16 %v110, %v109
    %v120 = vpack.c.b16 %v112, %v111
    %129 = vmatpush.bf16.msra.mxu0 %v120
    %130 = vmatpush.bf16.msra.mxu0 %v119
    %131 = vmatpush.bf16.msra.mxu0 %v118
    %132 = vmatpush.bf16.msra.mxu0 %v117
    %133 = vmatpush.bf16.msra.mxu0 %v116
    %134 = vmatpush.bf16.msra.mxu0 %v115
    %135 = vmatpush.bf16.msra.mxu0 %v114
    %136 = vmatpush.bf16.msra.mxu0 %v113
    %137 = vmatmul.bf16.gmra.mxu0 %v77
    %v138 = vpop.f32.mrf.mxu0
    %v139 = vadd.f32 %v79, %v138
    %v140 = vpop.f32.mrf.mxu0
    %v141 = vadd.f32 %v79, %v140
    %142 = vdwg.mxu0
    %v143 = vmax.f32 %v139, 0.0
    %v144 = vmax.f32 %v141, 0.0
    %v145 = vld [vmem:[#allocation2] sm:$0xf]
    %v146 = vld [vmem:[#allocation2 + $0x4] sm:$0xf]
    %v147 = vld [vmem:[#allocation2 + $0x8] sm:$0xf]
    %v148 = vld [vmem:[#allocation2 + $0xc] sm:$0xf]
    %v149 = vld [vmem:[#allocation2 + $0x10] sm:$0xf]
    %v150 = vld [vmem:[#allocation2 + $0x14] sm:$0xf]
    %v151 = vld [vmem:[#allocation2 + $0x18] sm:$0xf]
    %v152 = vld [vmem:[#allocation2 + $0x1c] sm:$0xf]
    %v153 = vld [vmem:[#allocation2 + $0x20] sm:$0xf]
    %v154 = vld [vmem:[#allocation2 + $0x24] sm:$0xf]
    %v155 = vld [vmem:[#allocation2 + $0x28] sm:$0xf]
    %v156 = vld [vmem:[#allocation2 + $0x2c] sm:$0xf]
    %v157 = vld [vmem:[#allocation2 + $0x30] sm:$0xf]
    %v158 = vld [vmem:[#allocation2 + $0x34] sm:$0xf]
    %v159 = vld [vmem:[#allocation2 + $0x38] sm:$0xf]
    %v160 = vld [vmem:[#allocation2 + $0x3c] sm:$0xf]
    %v161 = vld [vmem:[%s4] sm:$0x1]
    %v162 = vpack.c.bf16 %v144, %v143
    %v164 = vperm.slane %v161, 0
    %v182 = vunpack.c.l.b16 %v145
    %v183 = vunpack.c.l.b16 %v146
    %v184 = vunpack.c.l.b16 %v147
    %v185 = vunpack.c.l.b16 %v148
    %v186 = vunpack.c.l.b16 %v149
    %v187 = vunpack.c.l.b16 %v150
    %v188 = vunpack.c.l.b16 %v151
    %v189 = vunpack.c.l.b16 %v152
    %v190 = vunpack.c.l.b16 %v153
    %v191 = vunpack.c.l.b16 %v154
    %v192 = vunpack.c.l.b16 %v155
    %v193 = vunpack.c.l.b16 %v156
    %v194 = vunpack.c.l.b16 %v157
    %v195 = vunpack.c.l.b16 %v158
    %v196 = vunpack.c.l.b16 %v159
    %v197 = vunpack.c.l.b16 %v160
    %v198 = vpack.c.b16 %v183, %v182
    %v199 = vpack.c.b16 %v185, %v184
    %v200 = vpack.c.b16 %v187, %v186
    %v201 = vpack.c.b16 %v189, %v188
    %v202 = vpack.c.b16 %v191, %v190
    %v203 = vpack.c.b16 %v193, %v192
    %v204 = vpack.c.b16 %v195, %v194
    %v205 = vpack.c.b16 %v197, %v196
    %214 = vmatpush.bf16.msra.mxu0 %v205
    %215 = vmatpush.bf16.msra.mxu0 %v204
    %216 = vmatpush.bf16.msra.mxu0 %v203
    %217 = vmatpush.bf16.msra.mxu0 %v202
    %218 = vmatpush.bf16.msra.mxu0 %v201
    %219 = vmatpush.bf16.msra.mxu0 %v200
    %220 = vmatpush.bf16.msra.mxu0 %v199
    %221 = vmatpush.bf16.msra.mxu0 %v198
    %222 = vmatmul.bf16.gmra.mxu0 %v162
    %v223 = vpop.f32.mrf.mxu0
    %v224 = vadd.f32 %v164, %v223
    %v225 = vpop.f32.mrf.mxu0
    %v226 = vadd.f32 %v164, %v225
    %227 = vdwg.mxu0
    %v228 = vmax.f32 %v224, 0.0
    %v229 = vmax.f32 %v226, 0.0
    %v230 = vld [vmem:[#allocation4] sm:$0xf]
    %v231 = vld [vmem:[#allocation4 + $0x4] sm:$0xf]
    %v232 = vld [vmem:[#allocation4 + $0x8] sm:$0xf]
    %v233 = vld [vmem:[#allocation4 + $0xc] sm:$0xf]
    %v234 = vld [vmem:[#allocation4 + $0x10] sm:$0xf]
    %v235 = vld [vmem:[#allocation4 + $0x14] sm:$0xf]
    %v236 = vld [vmem:[#allocation4 + $0x18] sm:$0xf]
    %v237 = vld [vmem:[#allocation4 + $0x1c] sm:$0xf]
    %v238 = vld [vmem:[#allocation4 + $0x20] sm:$0xf]
    %v239 = vld [vmem:[#allocation4 + $0x24] sm:$0xf]
    %v240 = vld [vmem:[#allocation4 + $0x28] sm:$0xf]
    %v241 = vld [vmem:[#allocation4 + $0x2c] sm:$0xf]
    %v242 = vld [vmem:[#allocation4 + $0x30] sm:$0xf]
    %v243 = vld [vmem:[#allocation4 + $0x34] sm:$0xf]
    %v244 = vld [vmem:[#allocation4 + $0x38] sm:$0xf]
    %v245 = vld [vmem:[#allocation4 + $0x3c] sm:$0xf]
    %v246 = vld [vmem:[%s6] sm:$0x1]
    %v247 = vpack.c.bf16 %v229, %v228
    %v249 = vperm.slane %v246, 0
    %v267 = vunpack.c.l.b16 %v230
    %v268 = vunpack.c.l.b16 %v231
    %v269 = vunpack.c.l.b16 %v232
    %v270 = vunpack.c.l.b16 %v233
    %v271 = vunpack.c.l.b16 %v234
    %v272 = vunpack.c.l.b16 %v235
    %v273 = vunpack.c.l.b16 %v236
    %v274 = vunpack.c.l.b16 %v237
    %v275 = vunpack.c.l.b16 %v238
    %v276 = vunpack.c.l.b16 %v239
    %v277 = vunpack.c.l.b16 %v240
    %v278 = vunpack.c.l.b16 %v241
    %v279 = vunpack.c.l.b16 %v242
    %v280 = vunpack.c.l.b16 %v243
    %v281 = vunpack.c.l.b16 %v244
    %v282 = vunpack.c.l.b16 %v245
    %v283 = vpack.c.b16 %v268, %v267
    %v284 = vpack.c.b16 %v270, %v269
    %v285 = vpack.c.b16 %v272, %v271
    %v286 = vpack.c.b16 %v274, %v273
    %v287 = vpack.c.b16 %v276, %v275
    %v288 = vpack.c.b16 %v278, %v277
    %v289 = vpack.c.b16 %v280, %v279
    %v290 = vpack.c.b16 %v282, %v281
    %299 = vmatpush.bf16.msra.mxu0 %v290
    %300 = vmatpush.bf16.msra.mxu0 %v289
    %301 = vmatpush.bf16.msra.mxu0 %v288
    %302 = vmatpush.bf16.msra.mxu0 %v287
    %303 = vmatpush.bf16.msra.mxu0 %v286
    %304 = vmatpush.bf16.msra.mxu0 %v285
    %305 = vmatpush.bf16.msra.mxu0 %v284
    %306 = vmatpush.bf16.msra.mxu0 %v283
    %307 = vmatmul.bf16.gmra.mxu0 %v247
    %v308 = vpop.f32.mrf.mxu0
    %v309 = vadd.f32 %v249, %v308
    %v310 = vpop.f32.mrf.mxu0
    %v311 = vadd.f32 %v249, %v310
    %312 = vdwg.mxu0
    %313 = vst [vmem:[%s7] sm:$0xff] %v309
    %314 = vst [vmem:[%s7 + $0x8] sm:$0xff] %v311
    // Predicated region
    $region38: #{_mlp_forward_prepared.1} parent=1 // pred_check
      _
    $region39: #{_mlp_forward_prepared.1} parent=1 // pred_check_branch
      %316 = sbr.rel (0) target = $region41
    $region40: #{_mlp_forward_prepared.1} parent=1 // pred_region
      _
    $region41: #{_mlp_forward_prepared.1} parent=1 // pred_fallthru
      _
    // Predicated region
    $region42: #{_mlp_forward_prepared.1} parent=1 // pred_check
      _
    $region43: #{_mlp_forward_prepared.1} parent=1 // pred_check_branch
      %318 = sbr.rel (0) target = $region45
    $region44: #{_mlp_forward_prepared.1} parent=1 // pred_region
      _
    $region45: #{_mlp_forward_prepared.1} parent=1 // pred_fallthru
      _
    %319 = vsyncpa [#allocation3], 1
    %320 = vsyncpa [#allocation5], 1

</llo_original>
